<compile_context>
chip_gen: v6e
topology: v6e:2x2x1
jax: 0.10.0
libtpu: 0.0.40
codegen_flags: <defaults>
</compile_context>

<pallas_src>
import functools

import jax
import jax.numpy as jnp
from jax.experimental import pallas as pl
from jax.experimental.pallas import tpu as pltpu


# ---------------------------------------------------------------------------
# Kernel
# ---------------------------------------------------------------------------
def _contrastive_loss_kernel(x_ref, y_ref, lbl_ref, out_ref,
                             dot_acc, nx2_acc, ny2_acc, *,
                             max_margin, feat_total, feat_block,
                             keep_input_dtype):
    """Grid = (batch_blocks [parallel], feature_blocks [arbitrary]).

    Accumulates <x,y>, ||x||^2, ||y||^2 per row across the feature axis in
    VMEM scratch, then emits the per-sample contrastive loss on the last
    feature block.
    """
    k = pl.program_id(1)
    nk = pl.num_programs(1)

    @pl.when(k == 0)
    def _init():
        dot_acc[...] = jnp.zeros_like(dot_acc)
        nx2_acc[...] = jnp.zeros_like(nx2_acc)
        ny2_acc[...] = jnp.zeros_like(ny2_acc)

    x = x_ref[...]
    y = y_ref[...]
    if not keep_input_dtype:
        # f32 math path (also used for mixed dtypes).
        x = x.astype(jnp.float32)
        y = y.astype(jnp.float32)

    if feat_total % feat_block != 0:
        # Ragged last feature block: zero the out-of-range tail columns so
        # garbage reads cannot pollute the row reductions.
        col = jax.lax.broadcasted_iota(jnp.int32, x.shape, 1)
        valid = (k * feat_block + col) < feat_total
        zero = jnp.zeros((), dtype=x.dtype)
        x = jnp.where(valid, x, zero)
        y = jnp.where(valid, y, zero)

    # Products stay in the (possibly bf16) input dtype; accumulation is f32.
    dot_acc[...] += jnp.sum(x * y, axis=1, keepdims=True, dtype=jnp.float32)
    nx2_acc[...] += jnp.sum(x * x, axis=1, keepdims=True, dtype=jnp.float32)
    ny2_acc[...] += jnp.sum(y * y, axis=1, keepdims=True, dtype=jnp.float32)

    @pl.when(k == nk - 1)
    def _finalize():
        lbl = lbl_ref[...].astype(jnp.float32)                      # (TB, 1)
        # 1 / max(||x||*||y||, eps) == rsqrt(max(||x||^2*||y||^2, eps^2)).
        eps2 = jnp.float32(1e-16)                                   # (1e-8)^2
        inv_denom = jax.lax.rsqrt(
            jnp.maximum(nx2_acc[...] * ny2_acc[...], eps2))
        cos_sim = dot_acc[...] * inv_denom
        distance = 1.0 - cos_sim
        margin = jnp.float32(max_margin) * (1.0 - lbl)
        pos = lbl * jnp.square(distance)
        neg = (1.0 - lbl) * jnp.square(jnp.maximum(margin - distance, 0.0))
        out_ref[...] = (pos + neg).astype(out_ref.dtype)


# ---------------------------------------------------------------------------
# Pure-JAX reference (mirrors the PyTorch forward; used for tiny inputs and
# for the in-script correctness checks).
# ---------------------------------------------------------------------------
def _reference_loss(output1, output2, label, max_margin=2.0):
    eps = 1e-8
    o1 = output1.astype(jnp.float32)
    o2 = output2.astype(jnp.float32)
    lbl = label.astype(jnp.float32)
    dot = jnp.sum(o1 * o2, axis=1)
    n1 = jnp.sum(o1 * o1, axis=1)
    n2 = jnp.sum(o2 * o2, axis=1)
    cos_sim = dot / jnp.sqrt(jnp.maximum(n1 * n2, eps * eps))
    distance = 1.0 - cos_sim
    margin = max_margin * (1.0 - lbl)
    return jnp.mean(lbl * jnp.square(distance)
                    + (1.0 - lbl)
                    * jnp.square(jnp.maximum(margin - distance, 0.0)))


# ---------------------------------------------------------------------------
# Tiling
# ---------------------------------------------------------------------------
def _vmem_capacity_bytes():
    try:
        info = pltpu.get_tpu_info()
        for attr in ("vmem_capacity_bytes", "vmem_bytes", "vmem_size_bytes"):
            val = getattr(info, attr, None)
            if val:
                return int(val)
    except Exception:
        pass
    return 64 * 1024 * 1024   # conservative (v7x-sized) fallback


def _round_down_mult(n, m):
    return (int(n) // m) * m


def _pick_tiling(B, D, itemsize, block_rows=None, block_cols=None):
    """Returns (TB, TD, vmem_limit_bytes), generation-aware."""
    cap = _vmem_capacity_bytes()
    # Per (input x pipeline-buffer) budget.  cap // 12 -> ~10.7 MiB on
    # v5e/v6e (128 MiB VMEM), ~5.3 MiB on v7x (64 MiB).  With 2 inputs x 2
    # pipeline buffers that is ~1/3 of physical VMEM.
    budget = max(512 * 1024, cap // 12)
    row_bytes = D * itemsize
    b_ceil8 = ((B + 7) // 8) * 8

    if block_cols is not None:
        td = max(128, _round_down_mult(block_cols, 128))
    elif 8 * row_bytes <= budget:
        td = D                       # whole feature axis stays in-lane
    else:
        # Feature axis too wide for a single VMEM block: split it into
        # 128-lane-multiple chunks reduced across an "arbitrary" grid axis.
        td = max(128, _round_down_mult(budget // (8 * itemsize), 128))

    tile_row_bytes = td * itemsize
    if block_rows is not None:
        tb = max(8, _round_down_mult(block_rows, 8))
    else:
        tb = max(8, _round_down_mult(budget // max(1, tile_row_bytes), 8))
    tb = min(tb, b_ceil8)
    if block_rows is None:
        # Keep the (parallel) batch axis at >= ~8 grid steps when B allows,
        # so the pipeline double-buffers and both v7x TensorCores get work.
        tb = min(tb, max(8, _round_down_mult(b_ceil8 // 8, 8)))

    block_bytes = tb * td * itemsize
    vmem_limit = 4 * block_bytes + (4 << 20)     # 2 inputs x 2 buffers + slack
    vmem_limit = max(vmem_limit, 16 << 20)
    vmem_limit = min(vmem_limit, max(16 << 20, cap - (12 << 20)))
    return tb, td, int(vmem_limit)


# ---------------------------------------------------------------------------
# Public wrapper
# ---------------------------------------------------------------------------
def multilabel_contrastive_loss(output1, output2, label, max_margin=2.0, *,
                                block_rows=None, block_cols=None,
                                use_pallas=None):
    """JAX/Pallas equivalent of MultiLabelContrastiveLoss.forward.

    output1, output2: (B, D) float arrays (f32 or bf16)
    label:            (B,)   float array (soft multi-label targets in [0, 1])
    Returns a scalar float32 loss.
    """
    B, D = output1.shape

    # Tiny problems: Pallas launch overhead dominates -> let XLA fuse it.
    if use_pallas is None:
        use_pallas = (B * D) >= (1 << 16)
    if not use_pallas:
        return _reference_loss(output1, output2, label, max_margin)

    itemsize = max(jnp.dtype(output1.dtype).itemsize,
                   jnp.dtype(output2.dtype).itemsize)
    tb, td, vmem_limit = _pick_tiling(B, D, itemsize, block_rows, block_cols)
    grid = (pl.cdiv(B, tb), pl.cdiv(D, td))

    label2d = label.reshape(B, 1).astype(jnp.float32)
    keep_input_dtype = (output1.dtype == jnp.bfloat16
                        and output2.dtype == jnp.bfloat16)

    kernel = functools.partial(
        _contrastive_loss_kernel,
        max_margin=float(max_margin),
        feat_total=D,
        feat_block=td,
        keep_input_dtype=keep_input_dtype,
    )

    in_bytes = B * D * (int(jnp.dtype(output1.dtype).itemsize)
                        + int(jnp.dtype(output2.dtype).itemsize))
    cost = pl.CostEstimate(
        flops=8 * B * D + 16 * B,
        transcendentals=B,                       # one rsqrt per row
        bytes_accessed=in_bytes + 4 * B + 4 * B,  # + label + per-sample out
    )

    per_sample = pl.pallas_call(
        kernel,
        out_shape=jax.ShapeDtypeStruct((B, 1), jnp.float32),
        grid=grid,
        in_specs=[
            pl.BlockSpec((tb, td), lambda i, k: (i, k)),
            pl.BlockSpec((tb, td), lambda i, k: (i, k)),
            pl.BlockSpec((tb, 1), lambda i, k: (i, 0)),
        ],
        out_specs=pl.BlockSpec((tb, 1), lambda i, k: (i, 0)),
        scratch_shapes=[pltpu.VMEM((tb, 1), jnp.float32)] * 3,
        compiler_params=pltpu.CompilerParams(
            dimension_semantics=("parallel", "arbitrary"),
            vmem_limit_bytes=vmem_limit,
        ),
        cost_estimate=cost,
    )(output1, output2, label2d)

    # torch.mean over the B per-sample losses.
    return jnp.sum(per_sample[:, 0]) / jnp.float32(B)


# ---------------------------------------------------------------------------
if __name__ == "__main__":
    key = jax.random.PRNGKey(0)
    ks = jax.random.split(key, 9)

    # Case 1: single-block shape, forced Pallas path.
    B, D = 8, 32
    o1 = jax.random.normal(ks[0], (B, D), dtype=jnp.float32)
    o2 = jax.random.normal(ks[1], (B, D), dtype=jnp.float32)
    lbl = jax.random.uniform(ks[2], (B,), dtype=jnp.float32)
    loss = multilabel_contrastive_loss(o1, o2, lbl, max_margin=2.0,
                                       use_pallas=True)
    jax.block_until_ready(loss)
    ref = _reference_loss(o1, o2, lbl, max_margin=2.0)
    assert jnp.allclose(loss, ref, atol=1e-5, rtol=1e-5), (loss, ref)

    # Case 2: batch not a multiple of the block -> ragged edge batch block,
    # no wrapper padding (masked edge writes).
    B2, D2 = 20, 32
    o1b = jax.random.normal(ks[3], (B2, D2), dtype=jnp.float32)
    o2b = jax.random.normal(ks[4], (B2, D2), dtype=jnp.float32)
    lblb = jax.random.uniform(ks[5], (B2,), dtype=jnp.float32)
    loss2 = multilabel_contrastive_loss(o1b, o2b, lblb, max_margin=2.0,
                                        block_rows=8, use_pallas=True)
    jax.block_until_ready(loss2)
    ref2 = _reference_loss(o1b, o2b, lblb, max_margin=2.0)
    assert jnp.allclose(loss2, ref2, atol=1e-5, rtol=1e-5), (loss2, ref2)

    # Case 3: split feature axis (reduction over the "arbitrary" grid axis)
    # with a ragged tail feature block (in-kernel column mask).
    B3, D3 = 16, 200
    o1c = jax.random.normal(ks[6], (B3, D3), dtype=jnp.float32)
    o2c = jax.random.normal(ks[7], (B3, D3), dtype=jnp.float32)
    lblc = jax.random.uniform(ks[8], (B3,), dtype=jnp.float32)
    loss3 = multilabel_contrastive_loss(o1c, o2c, lblc, max_margin=2.0,
                                        block_rows=8, block_cols=128,
                                        use_pallas=True)
    jax.block_until_ready(loss3)
    ref3 = _reference_loss(o1c, o2c, lblc, max_margin=2.0)
    assert jnp.allclose(loss3, ref3, atol=1e-5, rtol=1e-5), (loss3, ref3)

    # Case 4: bf16 inputs (bf16 products, f32 accumulation).
    o1d = o1c.astype(jnp.bfloat16)
    o2d = o2c.astype(jnp.bfloat16)
    loss4 = multilabel_contrastive_loss(o1d, o2d, lblc, max_margin=2.0,
                                        use_pallas=True)
    jax.block_until_ready(loss4)
    ref4 = _reference_loss(o1d, o2d, lblc, max_margin=2.0)
    assert jnp.allclose(loss4, ref4, atol=5e-2, rtol=5e-2), (loss4, ref4)

    # Case 5: auto-gated path (tiny input -> fused pure-JAX fallback).
    loss5 = multilabel_contrastive_loss(o1, o2, lbl, max_margin=2.0)
    jax.block_until_ready(loss5)
    assert jnp.allclose(loss5, ref, atol=1e-5, rtol=1e-5), (loss5, ref)

    print("KERNEL_OK")
</pallas_src>

<mosaic_0001>
module attributes {stable_mosaic.version = 11 : i64} {
  func.func @_contrastive_loss_kernel(%arg0: i32, %arg1: i32, %arg2: memref<8x32xf32, #tpu.memory_space<vmem>>, %arg3: memref<8x32xf32, #tpu.memory_space<vmem>>, %arg4: memref<8x1xf32, #tpu.memory_space<vmem>>, %arg5: memref<8x1xf32, #tpu.memory_space<vmem>>, %arg6: memref<8x1xf32, #tpu.memory_space<vmem>>, %arg7: memref<8x1xf32, #tpu.memory_space<vmem>>, %arg8: memref<8x1xf32, #tpu.memory_space<vmem>>) attributes {dimension_semantics = [#tpu.dimension_semantics<parallel>, #tpu.dimension_semantics<arbitrary>], iteration_bounds = array<i64: 1, 1>, scalar_prefetch = 0 : i64, scratch_operands = 3 : i64, tpu.core_type = #tpu.core_type<tc>, window_params = [{transform_indices = @transform_0, window_bounds = array<i64: 8, 32>}, {transform_indices = @transform_1, window_bounds = array<i64: 8, 32>}, {transform_indices = @transform_2, window_bounds = array<i64: 8, 1>}, {transform_indices = @transform_3, window_bounds = array<i64: 8, 1>}]} {
    %c0_i32 = arith.constant 0 : i32
    %0 = arith.cmpi eq, %arg1, %c0_i32 : i32
    %1 = arith.extui %0 : i1 to i32
    %c0_i32_0 = arith.constant 0 : i32
    %2 = arith.cmpi ne, %1, %c0_i32_0 : i32
    scf.if %2 {
      %cst_20 = arith.constant 0.000000e+00 : f32
      %26 = vector.broadcast %cst_20 : f32 to vector<8x1xf32>
      %c0_21 = arith.constant 0 : index
      %c0_22 = arith.constant 0 : index
      %27 = vector.load %arg6[%c0_21, %c0_22] : memref<8x1xf32, #tpu.memory_space<vmem>>, vector<8x1xf32>
      tpu.vector_store %arg6[%c0_21, %c0_22], %26 {strides = array<i32>} : memref<8x1xf32, #tpu.memory_space<vmem>>, vector<8x1xf32>,
      %cst_23 = arith.constant 0.000000e+00 : f32
      %28 = vector.broadcast %cst_23 : f32 to vector<8x1xf32>
      %c0_24 = arith.constant 0 : index
      %c0_25 = arith.constant 0 : index
      %29 = vector.load %arg7[%c0_24, %c0_25] : memref<8x1xf32, #tpu.memory_space<vmem>>, vector<8x1xf32>
      tpu.vector_store %arg7[%c0_24, %c0_25], %28 {strides = array<i32>} : memref<8x1xf32, #tpu.memory_space<vmem>>, vector<8x1xf32>,
      %cst_26 = arith.constant 0.000000e+00 : f32
      %30 = vector.broadcast %cst_26 : f32 to vector<8x1xf32>
      %c0_27 = arith.constant 0 : index
      %c0_28 = arith.constant 0 : index
      %31 = vector.load %arg8[%c0_27, %c0_28] : memref<8x1xf32, #tpu.memory_space<vmem>>, vector<8x1xf32>
      tpu.vector_store %arg8[%c0_27, %c0_28], %30 {strides = array<i32>} : memref<8x1xf32, #tpu.memory_space<vmem>>, vector<8x1xf32>,
    } else {
    }
    %c0 = arith.constant 0 : index
    %c0_1 = arith.constant 0 : index
    %3 = vector.load %arg2[%c0, %c0_1] : memref<8x32xf32, #tpu.memory_space<vmem>>, vector<8x32xf32>
    %c0_2 = arith.constant 0 : index
    %c0_3 = arith.constant 0 : index
    %4 = vector.load %arg3[%c0_2, %c0_3] : memref<8x32xf32, #tpu.memory_space<vmem>>, vector<8x32xf32>
    %c0_4 = arith.constant 0 : index
    %c0_5 = arith.constant 0 : index
    %5 = vector.load %arg6[%c0_4, %c0_5] : memref<8x1xf32, #tpu.memory_space<vmem>>, vector<8x1xf32>
    %6 = arith.mulf %3, %4 : vector<8x32xf32>
    %cst = arith.constant dense<0.000000e+00> : vector<8xf32>
    %7 = vector.multi_reduction <add>, %6, %cst [1] : vector<8x32xf32> to vector<8xf32>
    %8 = vector.shape_cast %7 : vector<8xf32> to vector<8x1xf32>
    %9 = arith.addf %5, %8 : vector<8x1xf32>
    %c0_6 = arith.constant 0 : index
    %c0_7 = arith.constant 0 : index
    %10 = vector.load %arg6[%c0_6, %c0_7] : memref<8x1xf32, #tpu.memory_space<vmem>>, vector<8x1xf32>
    tpu.vector_store %arg6[%c0_6, %c0_7], %9 {strides = array<i32>} : memref<8x1xf32, #tpu.memory_space<vmem>>, vector<8x1xf32>,
    %c0_8 = arith.constant 0 : index
    %c0_9 = arith.constant 0 : index
    %11 = vector.load %arg7[%c0_8, %c0_9] : memref<8x1xf32, #tpu.memory_space<vmem>>, vector<8x1xf32>
    %12 = arith.mulf %3, %3 : vector<8x32xf32>
    %cst_10 = arith.constant dense<0.000000e+00> : vector<8xf32>
    %13 = vector.multi_reduction <add>, %12, %cst_10 [1] : vector<8x32xf32> to vector<8xf32>
    %14 = vector.shape_cast %13 : vector<8xf32> to vector<8x1xf32>
    %15 = arith.addf %11, %14 : vector<8x1xf32>
    %c0_11 = arith.constant 0 : index
    %c0_12 = arith.constant 0 : index
    %16 = vector.load %arg7[%c0_11, %c0_12] : memref<8x1xf32, #tpu.memory_space<vmem>>, vector<8x1xf32>
    tpu.vector_store %arg7[%c0_11, %c0_12], %15 {strides = array<i32>} : memref<8x1xf32, #tpu.memory_space<vmem>>, vector<8x1xf32>,
    %c0_13 = arith.constant 0 : index
    %c0_14 = arith.constant 0 : index
    %17 = vector.load %arg8[%c0_13, %c0_14] : memref<8x1xf32, #tpu.memory_space<vmem>>, vector<8x1xf32>
    %18 = arith.mulf %4, %4 : vector<8x32xf32>
    %cst_15 = arith.constant dense<0.000000e+00> : vector<8xf32>
    %19 = vector.multi_reduction <add>, %18, %cst_15 [1] : vector<8x32xf32> to vector<8xf32>
    %20 = vector.shape_cast %19 : vector<8xf32> to vector<8x1xf32>
    %21 = arith.addf %17, %20 : vector<8x1xf32>
    %c0_16 = arith.constant 0 : index
    %c0_17 = arith.constant 0 : index
    %22 = vector.load %arg8[%c0_16, %c0_17] : memref<8x1xf32, #tpu.memory_space<vmem>>, vector<8x1xf32>
    tpu.vector_store %arg8[%c0_16, %c0_17], %21 {strides = array<i32>} : memref<8x1xf32, #tpu.memory_space<vmem>>, vector<8x1xf32>,
    %c0_i32_18 = arith.constant 0 : i32
    %23 = arith.cmpi eq, %arg1, %c0_i32_18 : i32
    %24 = arith.extui %23 : i1 to i32
    %c0_i32_19 = arith.constant 0 : i32
    %25 = arith.cmpi ne, %24, %c0_i32_19 : i32
    scf.if %25 {
      %c0_20 = arith.constant 0 : index
      %c0_21 = arith.constant 0 : index
      %26 = vector.load %arg4[%c0_20, %c0_21] : memref<8x1xf32, #tpu.memory_space<vmem>>, vector<8x1xf32>
      %c0_22 = arith.constant 0 : index
      %c0_23 = arith.constant 0 : index
      %27 = vector.load %arg7[%c0_22, %c0_23] : memref<8x1xf32, #tpu.memory_space<vmem>>, vector<8x1xf32>
      %c0_24 = arith.constant 0 : index
      %c0_25 = arith.constant 0 : index
      %28 = vector.load %arg8[%c0_24, %c0_25] : memref<8x1xf32, #tpu.memory_space<vmem>>, vector<8x1xf32>
      %29 = arith.mulf %27, %28 : vector<8x1xf32>
      %cst_26 = arith.constant 1.000000e-16 : f32
      %30 = vector.broadcast %cst_26 : f32 to vector<8x1xf32>
      %31 = arith.maximumf %29, %30 : vector<8x1xf32>
      %32 = math.rsqrt %31 : vector<8x1xf32>
      %c0_27 = arith.constant 0 : index
      %c0_28 = arith.constant 0 : index
      %33 = vector.load %arg6[%c0_27, %c0_28] : memref<8x1xf32, #tpu.memory_space<vmem>>, vector<8x1xf32>
      %34 = arith.mulf %33, %32 : vector<8x1xf32>
      %cst_29 = arith.constant 1.000000e+00 : f32
      %35 = vector.broadcast %cst_29 : f32 to vector<8x1xf32>
      %36 = arith.subf %35, %34 : vector<8x1xf32>
      %cst_30 = arith.constant 1.000000e+00 : f32
      %37 = vector.broadcast %cst_30 : f32 to vector<8x1xf32>
      %38 = arith.subf %37, %26 : vector<8x1xf32>
      %cst_31 = arith.constant 2.000000e+00 : f32
      %39 = vector.broadcast %cst_31 : f32 to vector<8x1xf32>
      %40 = arith.mulf %39, %38 : vector<8x1xf32>
      %41 = arith.mulf %36, %36 : vector<8x1xf32>
      %42 = arith.mulf %26, %41 : vector<8x1xf32>
      %cst_32 = arith.constant 1.000000e+00 : f32
      %43 = vector.broadcast %cst_32 : f32 to vector<8x1xf32>
      %44 = arith.subf %43, %26 : vector<8x1xf32>
      %45 = arith.subf %40, %36 : vector<8x1xf32>
      %cst_33 = arith.constant 0.000000e+00 : f32
      %46 = vector.broadcast %cst_33 : f32 to vector<8x1xf32>
      %47 = arith.maximumf %45, %46 : vector<8x1xf32>
      %48 = arith.mulf %47, %47 : vector<8x1xf32>
      %49 = arith.mulf %44, %48 : vector<8x1xf32>
      %50 = arith.addf %42, %49 : vector<8x1xf32>
      %c0_34 = arith.constant 0 : index
      %c0_35 = arith.constant 0 : index
      %51 = vector.load %arg5[%c0_34, %c0_35] : memref<8x1xf32, #tpu.memory_space<vmem>>, vector<8x1xf32>
      tpu.vector_store %arg5[%c0_34, %c0_35], %50 {strides = array<i32>} : memref<8x1xf32, #tpu.memory_space<vmem>>, vector<8x1xf32>,
    } else {
    }
    return
  }
  func.func @transform_0(%arg0: i32, %arg1: i32) -> (i32, i32) {
    %c0_i32 = arith.constant 0 : i32
    return %arg0, %arg1 : i32, i32
  }
  func.func @transform_1(%arg0: i32, %arg1: i32) -> (i32, i32) {
    %c0_i32 = arith.constant 0 : i32
    return %arg0, %arg1 : i32, i32
  }
  func.func @transform_2(%arg0: i32, %arg1: i32) -> (i32, i32) {
    %c0_i32 = arith.constant 0 : i32
    %c0_i32_0 = arith.constant 0 : i32
    return %arg0, %c0_i32 : i32, i32
  }
  func.func @transform_3(%arg0: i32, %arg1: i32) -> (i32, i32) {
    %c0_i32 = arith.constant 0 : i32
    %c0_i32_0 = arith.constant 0 : i32
    return %arg0, %c0_i32 : i32, i32
  }
}

</mosaic_0001>

<llo_original>
// kernel: tpu_custom_call.1
$region0: #{tpu_custom_call.1}
  #allocation0 [shape = 'u32[]', space=smem, size = 0x4, offset = 0x4, fixed_abs, tag = 'smem constant byte address 0x4 - core index']
  #allocation1 [shape = 'u32[144,128]{1,0:T(1,128)}', space=vmem, size = 0x12000, scoped, tag = 'internal scratch']
  #allocation2 [shape = 'f32[8,1]{1,0:T(8,128)}', space=vmem, size = 0x1000, scoped, tag = 'scratch operand']
  #allocation3 [shape = 'f32[8,1]{1,0:T(8,128)}', space=vmem, size = 0x1000, scoped, tag = 'scratch operand']
  #allocation4 [shape = 'f32[8,1]{1,0:T(8,128)}', space=vmem, size = 0x1000, scoped, tag = 'scratch operand']
  %s0 = inlined_call_operand.vmem [shape: f32[8,32], index: 0, kind: input, shape index: {}]
  %s1 = inlined_call_operand.hbm [shape: f32[8,32], index: 1, kind: input, shape index: {}]
  %s2 = inlined_call_operand.vmem [shape: f32[8,1], index: 2, kind: input, shape index: {}]
  %s3 = inlined_call_operand.vmem [shape: f32[8,1], index: 3, kind: output, shape index: {}]
  %s4 = sld [smem:[#allocation0]]
  $region34: #{tpu_custom_call.1} parent=0
    _
  %s6 = ssub.s32 1, %s4
  %s7 = scalar_select 0, %s6, %s4
  $region1: #{tpu_custom_call.1} parent=0
    #allocation5 [shape = 'u8[4096]{0}', space=vmem, size = 0x1000, scoped, tag = 'input window, operand 1, single buffered']
    #allocation6 [shape = 's32[1]{0}', space=sflag, size = 0x4, scoped, tag = 'scoped memory for tpu_custom_call.1']
    %8 = vsyncpa [#allocation6], 0
    // Predicated region
    $region2: #{tpu_custom_call.1} parent=1 // pred_check
      _
    $region3: #{tpu_custom_call.1} parent=1 // pred_check_branch
      %10 = sbr.rel (0) target = $region5
    $region4: #{tpu_custom_call.1} parent=1 // pred_region
      _
    $region5: #{tpu_custom_call.1} parent=1 // pred_fallthru
      _
    // Predicated region
    $region6: #{tpu_custom_call.1} parent=1 // pred_check
      _
    $region7: #{tpu_custom_call.1} parent=1 // pred_check_branch
      %12 = sbr.rel (0) target = $region9
    $region8: #{tpu_custom_call.1} parent=1 // pred_region
      %s14 = ssub.s32 128, 128
      %15 = vsyncadd [#allocation6], %s14
      %s17 = sshll.u32 [#allocation5], 4
      %s18 = int_to_ptr.vmem [resolvable:$true] %s17
      %20 = dma.hbm_to_vmem [thread:$0]  %s1, 128, %s18, [#allocation6]
    $region9: #{tpu_custom_call.1} parent=1 // pred_fallthru
      _
    // Predicated region
    $region10: #{tpu_custom_call.1} parent=1 // pred_check
      _
    $region11: #{tpu_custom_call.1} parent=1 // pred_check_branch
      %22 = sbr.rel (0) target = $region13
    $region12: #{tpu_custom_call.1} parent=1 // pred_region
      _
    $region13: #{tpu_custom_call.1} parent=1 // pred_fallthru
      _
    // Predicated region
    $region14: #{tpu_custom_call.1} parent=1 // pred_check
      _
    $region15: #{tpu_custom_call.1} parent=1 // pred_check_branch
      %24 = sbr.rel (0) target = $region17
    $region16: #{tpu_custom_call.1} parent=1 // pred_region
      %25 = dma.done [#allocation6], 128
    $region17: #{tpu_custom_call.1} parent=1 // pred_fallthru
      _
    %p26 = scmp.eq.s32.totalorder 0, 0
    // Predicated region
    $region18: #{tpu_custom_call.1} parent=1 // pred_check
      %p27 = pneg %p26
    $region19: #{tpu_custom_call.1} parent=1 // pred_check_branch
      %29 = sbr.rel (%p27) target = $region21
    $region20: #{tpu_custom_call.1} parent=1 // pred_region
      %vm30 = vcmask 7168
      %31 = vst.msk [vmem:[#allocation2] sm:$0xff] %vm30, 0.0
      %32 = vst.msk [vmem:[#allocation3] sm:$0xff] %vm30, 0.0
      %33 = vst.msk [vmem:[#allocation4] sm:$0xff] %vm30, 0.0
    $region21: #{tpu_custom_call.1} parent=1 // pred_fallthru
      _
    %v34 = vld [vmem:[%s0] sm:$0xff]
    %v35 = vld [vmem:[#allocation5] sm:$0xff]
    %v36 = vld [vmem:[#allocation2] sm:$0xff]
    %v37 = vmul.f32 %v34, %v35
    %vm38 = vcmask 261120
    %v39 = vsel %vm38, %v37, 0.0
    %40 = vadd.xlane.f32.xlu0 %v39
    %v41 = vpop.xlane.xlu0 %40
    %v42 = vadd.f32 %v36, %v41
    %vm43 = vcmask 7168
    %44 = vst.msk [vmem:[#allocation2] sm:$0xff] %vm43, %v42
    %v45 = vld [vmem:[#allocation3] sm:$0xff]
    %v46 = vmul.f32 %v34, %v34
    %v47 = vsel %vm38, %v46, 0.0
    %48 = vadd.xlane.f32.xlu0 %v47
    %v49 = vpop.xlane.xlu0 %48
    %v50 = vadd.f32 %v45, %v49
    %51 = vst.msk [vmem:[#allocation3] sm:$0xff] %vm43, %v50
    %v52 = vld [vmem:[#allocation4] sm:$0xff]
    %v53 = vmul.f32 %v35, %v35
    %v54 = vsel %vm38, %v53, 0.0
    %55 = vadd.xlane.f32.xlu0 %v54
    %v56 = vpop.xlane.xlu0 %55
    %v57 = vadd.f32 %v52, %v56
    %58 = vst.msk [vmem:[#allocation4] sm:$0xff] %vm43, %v57
    // Predicated region
    $region22: #{tpu_custom_call.1} parent=1 // pred_check
      %p59 = pneg %p26
    $region23: #{tpu_custom_call.1} parent=1 // pred_check_branch
      %61 = sbr.rel (%p59) target = $region25
    $region24: #{tpu_custom_call.1} parent=1 // pred_region
      %v62 = vld [vmem:[%s2] sm:$0xff]
      %v63 = vld [vmem:[#allocation3] sm:$0xff]
      %v64 = vld [vmem:[#allocation4] sm:$0xff]
      %v65 = vmul.f32 %v63, %v64
      %v66 = vmax.f32 %v65, 1e-16
      %v67 = vrsqrt.pop %v66
      %v68 = vld [vmem:[#allocation2] sm:$0xff]
      %v69 = vmul.f32 %v68, %v67
      %v70 = vsub.f32 1.0, %v69
      %v71 = vsub.f32 1.0, %v62
      %v72 = vmul.f32 %v71, 2.0
      %v73 = vmul.f32 %v70, %v70
      %v74 = vmul.f32 %v62, %v73
      %v75 = vsub.f32 %v72, %v70
      %v76 = vmax.f32 %v75, 0.0
      %v77 = vmul.f32 %v76, %v76
      %v78 = vmul.f32 %v71, %v77
      %v79 = vadd.f32 %v74, %v78
      %80 = vst.msk [vmem:[%s3] sm:$0xff] %vm43, %v79
    $region25: #{tpu_custom_call.1} parent=1 // pred_fallthru
      _
    // Predicated region
    $region26: #{tpu_custom_call.1} parent=1 // pred_check
      _
    $region27: #{tpu_custom_call.1} parent=1 // pred_check_branch
      %82 = sbr.rel (0) target = $region29
    $region28: #{tpu_custom_call.1} parent=1 // pred_region
      _
    $region29: #{tpu_custom_call.1} parent=1 // pred_fallthru
      _
    // Predicated region
    $region30: #{tpu_custom_call.1} parent=1 // pred_check
      _
    $region31: #{tpu_custom_call.1} parent=1 // pred_check_branch
      %84 = sbr.rel (0) target = $region33
    $region32: #{tpu_custom_call.1} parent=1 // pred_region
      _
    $region33: #{tpu_custom_call.1} parent=1 // pred_fallthru
      _
    %85 = vsyncpa [#allocation6], 1

</llo_original>
